<compile_context>
chip_gen: v6e
topology: v6e:2x2x1
jax: 0.10.0
libtpu: 0.0.40
codegen_flags: <defaults>
</compile_context>

<pallas_src>
import functools

import jax
import jax.numpy as jnp
from jax.experimental import pallas as pl
from jax.experimental.pallas import tpu as pltpu


def _round_up(x, m):
    return (x + m - 1) // m * m


def _dqn_mlp_kernel(x_ref, w1_ref, b1_ref, w2_ref, b2_ref, w3_ref, b3_ref, o_ref):
    # x is already bf16 (cast in the wrapper); matmuls accumulate in f32 on the
    # MXU, bias add + ReLU run in f32 on the VPU.
    x = x_ref[...]

    h1 = jnp.dot(x, w1_ref[...], preferred_element_type=jnp.float32) + b1_ref[...]
    h1 = jnp.maximum(h1, 0.0)

    h2 = jnp.dot(h1.astype(jnp.bfloat16), w2_ref[...],
                 preferred_element_type=jnp.float32) + b2_ref[...]
    h2 = jnp.maximum(h2, 0.0)

    q = jnp.dot(h2.astype(jnp.bfloat16), w3_ref[...],
                preferred_element_type=jnp.float32) + b3_ref[...]
    o_ref[...] = q.astype(o_ref.dtype)


def prepare_dqn_params(params):
    """One-time conversion to the kernel's storage format (hoisted out of the
    per-call hot path): bf16 (in, out) weights for DMA/MXU, f32 (1, N) biases."""
    return {
        "w1": params["w1"].astype(jnp.bfloat16),
        "b1": params["b1"].astype(jnp.float32).reshape(1, -1),
        "w2": params["w2"].astype(jnp.bfloat16),
        "b2": params["b2"].astype(jnp.float32).reshape(1, -1),
        "w3": params["w3"].astype(jnp.bfloat16),
        "b3": params["b3"].astype(jnp.float32).reshape(1, -1),
    }


@functools.partial(jax.jit, static_argnames=("block_b",))
def dqn_forward(state, params, *, block_b=None):
    """state: (B, input_dim). params: output of prepare_dqn_params (bf16 weights)."""
    B, in_dim = state.shape
    out_dim = params["w3"].shape[1]

    # Halve the x DMA into the kernel (no-op if the caller already holds bf16).
    x = state.astype(jnp.bfloat16)

    # --- batch tiling -------------------------------------------------------
    # Small batches: a single full-batch block (full-dim block shapes are
    # always legal; zero pipeline overhead, no ragged handling).
    # Large batches: tile of up to 2048 rows, chosen so the grid has >= 2
    # steps (v7x has 2 TensorCores sharding the "parallel" axis). Working set
    # at 2048 rows is ~6 MiB, inside every chip's default scoped VMEM.
    if block_b is None:
        if B <= 1024:
            block_b = B
        else:
            block_b = min(2048, _round_up(-(-B // 2), 256))
    grid = (pl.cdiv(B, block_b),)

    flops = 2 * B * (in_dim * 128 + 128 * 256 + 256 * out_dim)
    bytes_accessed = (
        B * in_dim * 2                                        # x (bf16)
        + 2 * (in_dim * 128 + 128 * 256 + 256 * out_dim)      # weights (bf16)
        + 4 * (128 + 256 + out_dim)                           # biases (f32)
        + B * out_dim * 4                                     # output (f32)
    )

    out = pl.pallas_call(
        _dqn_mlp_kernel,
        out_shape=jax.ShapeDtypeStruct((B, out_dim), jnp.float32),
        grid=grid,
        in_specs=[
            pl.BlockSpec((block_b, in_dim), lambda i: (i, 0)),   # x: tiled on batch
            pl.BlockSpec((in_dim, 128), lambda i: (0, 0)),       # w1: resident
            pl.BlockSpec((1, 128), lambda i: (0, 0)),            # b1
            pl.BlockSpec((128, 256), lambda i: (0, 0)),          # w2
            pl.BlockSpec((1, 256), lambda i: (0, 0)),            # b2
            pl.BlockSpec((256, out_dim), lambda i: (0, 0)),      # w3 (full last dim)
            pl.BlockSpec((1, out_dim), lambda i: (0, 0)),        # b3
        ],
        out_specs=pl.BlockSpec((block_b, out_dim), lambda i: (i, 0)),
        compiler_params=pltpu.CompilerParams(
            dimension_semantics=("parallel",)),
        cost_estimate=pl.CostEstimate(
            flops=flops, transcendentals=0, bytes_accessed=bytes_accessed),
    )(x, params["w1"], params["b1"], params["w2"], params["b2"],
      params["w3"], params["b3"])

    return out


def init_dqn_params(key, input_dim, output_dim):
    """Deterministic init mimicking nn.Linear default (uniform +/- 1/sqrt(fan_in)).
    Weights stored as (in, out) = transpose of PyTorch's (out, in)."""
    dims = [(input_dim, 128), (128, 256), (256, output_dim)]
    params = {}
    for i, (fin, fout) in enumerate(dims, start=1):
        key, kw, kb = jax.random.split(key, 3)
        bound = 1.0 / jnp.sqrt(fin)
        params[f"w{i}"] = jax.random.uniform(
            kw, (fin, fout), jnp.float32, -bound, bound)
        params[f"b{i}"] = jax.random.uniform(
            kb, (1, fout), jnp.float32, -bound, bound)
    return params


def dqn_reference_f32(state, params):
    """Pure f32 reference (PyTorch module semantics)."""
    h1 = jnp.maximum(state @ params["w1"] + params["b1"], 0.0)
    h2 = jnp.maximum(h1 @ params["w2"] + params["b2"], 0.0)
    return h2 @ params["w3"] + params["b3"]


def dqn_reference_mixed(state, params):
    """Reference mirroring the kernel's bf16-in / f32-accumulate precision."""
    def mm(a, w):
        return jnp.dot(a.astype(jnp.bfloat16), w.astype(jnp.bfloat16),
                       preferred_element_type=jnp.float32)
    h1 = jnp.maximum(mm(state, params["w1"]) + params["b1"], 0.0)
    h2 = jnp.maximum(mm(h1, params["w2"]) + params["b2"], 0.0)
    return mm(h2, params["w3"]) + params["b3"]


if __name__ == "__main__":
    key = jax.random.PRNGKey(0)
    input_dim = 32    # corresponds to input_dim[0] in the PyTorch module
    output_dim = 8
    batch = 8

    kp, kx, kx2 = jax.random.split(key, 3)
    params = init_dqn_params(kp, input_dim, output_dim)
    prepped = prepare_dqn_params(params)   # one-time, outside the hot path

    # --- small-batch (single-block) path ---
    state = jax.random.normal(kx, (batch, input_dim), jnp.float32)
    qvals = jax.block_until_ready(dqn_forward(state, prepped))
    assert qvals.shape == (batch, output_dim)
    assert jnp.allclose(qvals, dqn_reference_mixed(state, params),
                        atol=2e-3, rtol=2e-3), "mismatch vs mixed-precision reference"
    assert jnp.allclose(qvals, dqn_reference_f32(state, params),
                        atol=5e-2, rtol=5e-2), "mismatch vs f32 reference"

    # --- ragged multi-block path (exercises masking of the last partial tile) ---
    state2 = jax.random.normal(kx2, (300, input_dim), jnp.float32)
    q2 = jax.block_until_ready(dqn_forward(state2, prepped, block_b=256))
    assert q2.shape == (300, output_dim)
    assert jnp.allclose(q2, dqn_reference_mixed(state2, params),
                        atol=2e-3, rtol=2e-3), "mismatch on ragged grid"

    print("KERNEL_OK")
</pallas_src>

<mosaic_0001>
module attributes {stable_mosaic.version = 11 : i64} {
  func.func @_dqn_mlp_kernel(%arg0: i32, %arg1: memref<8x32xbf16, #tpu.memory_space<vmem>>, %arg2: memref<32x128xbf16, #tpu.memory_space<vmem>>, %arg3: memref<1x128xf32, #tpu.memory_space<vmem>>, %arg4: memref<128x256xbf16, #tpu.memory_space<vmem>>, %arg5: memref<1x256xf32, #tpu.memory_space<vmem>>, %arg6: memref<256x8xbf16, #tpu.memory_space<vmem>>, %arg7: memref<1x8xf32, #tpu.memory_space<vmem>>, %arg8: memref<8x8xf32, #tpu.memory_space<vmem>>) attributes {dimension_semantics = [#tpu.dimension_semantics<parallel>], iteration_bounds = array<i64: 1>, scalar_prefetch = 0 : i64, scratch_operands = 0 : i64, tpu.core_type = #tpu.core_type<tc>, window_params = [{transform_indices = @transform_0, window_bounds = array<i64: 8, 32>}, {pipeline_mode = #tpu.pipeline_mode<synchronous>, transform_indices = @transform_1, window_bounds = array<i64: 32, 128>}, {pipeline_mode = #tpu.pipeline_mode<synchronous>, transform_indices = @transform_2, window_bounds = array<i64: 1, 128>}, {pipeline_mode = #tpu.pipeline_mode<synchronous>, transform_indices = @transform_3, window_bounds = array<i64: 128, 256>}, {pipeline_mode = #tpu.pipeline_mode<synchronous>, transform_indices = @transform_4, window_bounds = array<i64: 1, 256>}, {pipeline_mode = #tpu.pipeline_mode<synchronous>, transform_indices = @transform_5, window_bounds = array<i64: 256, 8>}, {pipeline_mode = #tpu.pipeline_mode<synchronous>, transform_indices = @transform_6, window_bounds = array<i64: 1, 8>}, {transform_indices = @transform_7, window_bounds = array<i64: 8, 8>}]} {
    %c0 = arith.constant 0 : index
    %c0_0 = arith.constant 0 : index
    %0 = vector.load %arg1[%c0, %c0_0] : memref<8x32xbf16, #tpu.memory_space<vmem>>, vector<8x32xbf16>
    %c0_1 = arith.constant 0 : index
    %c0_2 = arith.constant 0 : index
    %1 = vector.load %arg2[%c0_1, %c0_2] : memref<32x128xbf16, #tpu.memory_space<vmem>>, vector<32x128xbf16>
    %cst = arith.constant dense<0.000000e+00> : vector<8x128xf32>
    %2 = tpu.matmul %0, %1, %cst {dimension_numbers = #tpu.dot_dimension_numbers<[1], [0], [0], [1], [0, 0, 1, 1], [], []>} : vector<8x32xbf16>, vector<32x128xbf16>, vector<8x128xf32> -> vector<8x128xf32>
    %c0_3 = arith.constant 0 : index
    %c0_4 = arith.constant 0 : index
    %3 = vector.load %arg3[%c0_3, %c0_4] : memref<1x128xf32, #tpu.memory_space<vmem>>, vector<1x128xf32>
    %4 = vector.broadcast %3 : vector<1x128xf32> to vector<8x128xf32>
    %5 = arith.addf %2, %4 : vector<8x128xf32>
    %cst_5 = arith.constant 0.000000e+00 : f32
    %6 = vector.broadcast %cst_5 : f32 to vector<8x128xf32>
    %7 = arith.maximumf %5, %6 : vector<8x128xf32>
    %8 = arith.truncf %7 : vector<8x128xf32> to vector<8x128xbf16>
    %c0_6 = arith.constant 0 : index
    %c0_7 = arith.constant 0 : index
    %9 = vector.load %arg4[%c0_6, %c0_7] : memref<128x256xbf16, #tpu.memory_space<vmem>>, vector<128x256xbf16>
    %cst_8 = arith.constant dense<0.000000e+00> : vector<8x256xf32>
    %10 = tpu.matmul %8, %9, %cst_8 {dimension_numbers = #tpu.dot_dimension_numbers<[1], [0], [0], [1], [0, 0, 1, 1], [], []>} : vector<8x128xbf16>, vector<128x256xbf16>, vector<8x256xf32> -> vector<8x256xf32>
    %c0_9 = arith.constant 0 : index
    %c0_10 = arith.constant 0 : index
    %11 = vector.load %arg5[%c0_9, %c0_10] : memref<1x256xf32, #tpu.memory_space<vmem>>, vector<1x256xf32>
    %12 = vector.broadcast %11 : vector<1x256xf32> to vector<8x256xf32>
    %13 = arith.addf %10, %12 : vector<8x256xf32>
    %cst_11 = arith.constant 0.000000e+00 : f32
    %14 = vector.broadcast %cst_11 : f32 to vector<8x256xf32>
    %15 = arith.maximumf %13, %14 : vector<8x256xf32>
    %16 = arith.truncf %15 : vector<8x256xf32> to vector<8x256xbf16>
    %c0_12 = arith.constant 0 : index
    %c0_13 = arith.constant 0 : index
    %17 = vector.load %arg6[%c0_12, %c0_13] : memref<256x8xbf16, #tpu.memory_space<vmem>>, vector<256x8xbf16>
    %cst_14 = arith.constant dense<0.000000e+00> : vector<8x8xf32>
    %18 = tpu.matmul %16, %17, %cst_14 {dimension_numbers = #tpu.dot_dimension_numbers<[1], [0], [0], [1], [0, 0, 1, 1], [], []>} : vector<8x256xbf16>, vector<256x8xbf16>, vector<8x8xf32> -> vector<8x8xf32>
    %c0_15 = arith.constant 0 : index
    %c0_16 = arith.constant 0 : index
    %19 = vector.load %arg7[%c0_15, %c0_16] : memref<1x8xf32, #tpu.memory_space<vmem>>, vector<1x8xf32>
    %20 = vector.broadcast %19 : vector<1x8xf32> to vector<8x8xf32>
    %21 = arith.addf %18, %20 : vector<8x8xf32>
    %c0_17 = arith.constant 0 : index
    %c0_18 = arith.constant 0 : index
    %22 = vector.load %arg8[%c0_17, %c0_18] : memref<8x8xf32, #tpu.memory_space<vmem>>, vector<8x8xf32>
    tpu.vector_store %arg8[%c0_17, %c0_18], %21 {strides = array<i32>} : memref<8x8xf32, #tpu.memory_space<vmem>>, vector<8x8xf32>,
    return
  }
  func.func @transform_0(%arg0: i32) -> (i32, i32) {
    %c0_i32 = arith.constant 0 : i32
    %c0_i32_0 = arith.constant 0 : i32
    return %arg0, %c0_i32 : i32, i32
  }
  func.func @transform_1(%arg0: i32) -> (i32, i32) {
    %c0_i32 = arith.constant 0 : i32
    %c0_i32_0 = arith.constant 0 : i32
    %c0_i32_1 = arith.constant 0 : i32
    return %c0_i32, %c0_i32_0 : i32, i32
  }
  func.func @transform_2(%arg0: i32) -> (i32, i32) {
    %c0_i32 = arith.constant 0 : i32
    %c0_i32_0 = arith.constant 0 : i32
    %c0_i32_1 = arith.constant 0 : i32
    return %c0_i32, %c0_i32_0 : i32, i32
  }
  func.func @transform_3(%arg0: i32) -> (i32, i32) {
    %c0_i32 = arith.constant 0 : i32
    %c0_i32_0 = arith.constant 0 : i32
    %c0_i32_1 = arith.constant 0 : i32
    return %c0_i32, %c0_i32_0 : i32, i32
  }
  func.func @transform_4(%arg0: i32) -> (i32, i32) {
    %c0_i32 = arith.constant 0 : i32
    %c0_i32_0 = arith.constant 0 : i32
    %c0_i32_1 = arith.constant 0 : i32
    return %c0_i32, %c0_i32_0 : i32, i32
  }
  func.func @transform_5(%arg0: i32) -> (i32, i32) {
    %c0_i32 = arith.constant 0 : i32
    %c0_i32_0 = arith.constant 0 : i32
    %c0_i32_1 = arith.constant 0 : i32
    return %c0_i32, %c0_i32_0 : i32, i32
  }
  func.func @transform_6(%arg0: i32) -> (i32, i32) {
    %c0_i32 = arith.constant 0 : i32
    %c0_i32_0 = arith.constant 0 : i32
    %c0_i32_1 = arith.constant 0 : i32
    return %c0_i32, %c0_i32_0 : i32, i32
  }
  func.func @transform_7(%arg0: i32) -> (i32, i32) {
    %c0_i32 = arith.constant 0 : i32
    %c0_i32_0 = arith.constant 0 : i32
    return %arg0, %c0_i32 : i32, i32
  }
}

</mosaic_0001>

<llo_original>
// kernel: dqn_forward.1
$region0: #{dqn_forward.1}
  #allocation0 [shape = 'u32[]', space=smem, size = 0x4, offset = 0x4, fixed_abs, tag = 'smem constant byte address 0x4 - core index']
  #allocation1 [shape = 'u32[144,128]{1,0:T(1,128)}', space=vmem, size = 0x12000, scoped, tag = 'internal scratch']
  %s0 = inlined_call_operand.vmem [shape: bf16[8,32], index: 0, kind: input, shape index: {}]
  %s1 = inlined_call_operand.vmem [shape: bf16[32,128], index: 1, kind: input, shape index: {}]
  %s2 = inlined_call_operand.vmem [shape: f32[1,128], index: 2, kind: input, shape index: {}]
  %s3 = inlined_call_operand.vmem [shape: bf16[128,256], index: 3, kind: input, shape index: {}]
  %s4 = inlined_call_operand.vmem [shape: f32[1,256], index: 4, kind: input, shape index: {}]
  %s5 = inlined_call_operand.vmem [shape: bf16[256,8], index: 5, kind: input, shape index: {}]
  %s6 = inlined_call_operand.vmem [shape: f32[1,8], index: 6, kind: input, shape index: {}]
  %s7 = inlined_call_operand.hbm [shape: f32[8,8], index: 7, kind: output, shape index: {}]
  %s8 = sld [smem:[#allocation0]]
  $region38: #{dqn_forward.1} parent=0
    _
  %s10 = ssub.s32 1, %s8
  %s11 = scalar_select 0, %s10, %s8
  $region1: #{dqn_forward.1} parent=0
    #allocation2 [shape = 'u8[4096]{0}', space=vmem, size = 0x1000, scoped, tag = 'output window, operand 0, single buffered']
    #allocation3 [shape = 's32[1]{0}', space=sflag, size = 0x4, scoped, tag = 'scoped memory for dqn_forward.1']
    %12 = vsyncpa [#allocation3], 0
    // Predicated region
    $region2: #{dqn_forward.1} parent=1 // pred_check
      _
    $region3: #{dqn_forward.1} parent=1 // pred_check_branch
      %14 = sbr.rel (0) target = $region5
    $region4: #{dqn_forward.1} parent=1 // pred_region
      _
    $region5: #{dqn_forward.1} parent=1 // pred_fallthru
      _
    // Predicated region
    $region6: #{dqn_forward.1} parent=1 // pred_check
      _
    $region7: #{dqn_forward.1} parent=1 // pred_check_branch
      %16 = sbr.rel (0) target = $region9
    $region8: #{dqn_forward.1} parent=1 // pred_region
      _
    $region9: #{dqn_forward.1} parent=1 // pred_fallthru
      _
    // Predicated region
    $region10: #{dqn_forward.1} parent=1 // pred_check
      _
    $region11: #{dqn_forward.1} parent=1 // pred_check_branch
      %18 = sbr.rel (0) target = $region13
    $region12: #{dqn_forward.1} parent=1 // pred_region
      _
    $region13: #{dqn_forward.1} parent=1 // pred_fallthru
      _
    // Predicated region
    $region14: #{dqn_forward.1} parent=1 // pred_check
      _
    $region15: #{dqn_forward.1} parent=1 // pred_check_branch
      %20 = sbr.rel (0) target = $region17
    $region16: #{dqn_forward.1} parent=1 // pred_region
      _
    $region17: #{dqn_forward.1} parent=1 // pred_fallthru
      _
    // Predicated region
    $region18: #{dqn_forward.1} parent=1 // pred_check
      _
    $region19: #{dqn_forward.1} parent=1 // pred_check_branch
      %22 = sbr.rel (0) target = $region21
    $region20: #{dqn_forward.1} parent=1 // pred_region
      _
    $region21: #{dqn_forward.1} parent=1 // pred_fallthru
      _
    // Predicated region
    $region22: #{dqn_forward.1} parent=1 // pred_check
      _
    $region23: #{dqn_forward.1} parent=1 // pred_check_branch
      %24 = sbr.rel (0) target = $region25
    $region24: #{dqn_forward.1} parent=1 // pred_region
      _
    $region25: #{dqn_forward.1} parent=1 // pred_fallthru
      _
    // Predicated region
    $region26: #{dqn_forward.1} parent=1 // pred_check
      _
    $region27: #{dqn_forward.1} parent=1 // pred_check_branch
      %26 = sbr.rel (0) target = $region29
    $region28: #{dqn_forward.1} parent=1 // pred_region
      _
    $region29: #{dqn_forward.1} parent=1 // pred_fallthru
      _
    %v28 = vld [vmem:[%s0] sm:$0xf]
    %v29 = vld [vmem:[%s1] sm:$0xf]
    %v30 = vld [vmem:[%s1 + $0x4] sm:$0xf]
    %v31 = vld [vmem:[%s1 + $0x8] sm:$0xf]
    %v32 = vld [vmem:[%s1 + $0xc] sm:$0xf]
    %v33 = vld [vmem:[%s2] sm:$0x1]
    %v35 = vlaneseq
    %v36 = vshrl.u32 %v35, 7
    %v37 = vsub.s32 0, %v36
    %v38 = vrot.slane %v33, %v37
    %v44 = vunpack.c.l.b16 %v29
    %v45 = vunpack.c.l.b16 %v30
    %v46 = vunpack.c.l.b16 %v31
    %v47 = vunpack.c.l.b16 %v32
    %v48 = vpack.c.b16 %v45, %v44
    %v49 = vpack.c.b16 %v47, %v46
    %vm52 = vcmask 261120
    %v54 = vsel %vm52, %v28, 0
    %56 = vmatprep.subr.bf16.mxu0 0
    %57 = vmatpush1.bf16.msra.mxu0 0
    %58 = vmatprep.subr.bf16.mxu0 0
    %59 = vmatpush1.bf16.msra.mxu0 0
    %60 = vmatprep.subr.bf16.mxu0 0
    %61 = vmatpush1.bf16.msra.mxu0 0
    %62 = vmatprep.subr.bf16.mxu0 0
    %63 = vmatpush1.bf16.msra.mxu0 0
    %64 = vmatprep.subr.bf16.mxu0 0
    %65 = vmatpush1.bf16.msra.mxu0 0
    %66 = vmatprep.subr.bf16.mxu0 0
    %67 = vmatpush1.bf16.msra.mxu0 0
    %68 = vmatprep.subr.bf16.mxu0 0
    %69 = vmatpush1.bf16.msra.mxu0 %v49
    %70 = vmatprep.subr.bf16.mxu0 0
    %71 = vmatpush1.bf16.msra.mxu0 %v48
    %72 = vmatprep.subr.bf16.mxu0 0
    %73 = vmatpush2.bf16.msra.mxu0 0
    %74 = vmatprep.subr.bf16.mxu0 0
    %75 = vmatpush2.bf16.msra.mxu0 0
    %76 = vmatprep.subr.bf16.mxu0 0
    %77 = vmatpush2.bf16.msra.mxu0 0
    %78 = vmatprep.subr.bf16.mxu0 0
    %79 = vmatpush2.bf16.msra.mxu0 0
    %80 = vmatprep.subr.bf16.mxu0 0
    %81 = vmatpush2.bf16.msra.mxu0 0
    %82 = vmatprep.subr.bf16.mxu0 0
    %83 = vmatpush2.bf16.msra.mxu0 0
    %84 = vmatprep.subr.bf16.mxu0 0
    %85 = vmatpush2.bf16.msra.mxu0 0
    %86 = vmatprep.subr.bf16.mxu0 0
    %87 = vmatpush2.bf16.msra.mxu0 0
    %88 = vmatprep.mubr.bf16.mxu0 0
    %89 = vmatmul.mubr.bf16.gmra.mxu0 %v54
    %v90 = vpop.f32.mrf.mxu0
    %v91 = vadd.f32 %v38, %v90
    %v92 = vpop.f32.mrf.mxu0
    %v93 = vpop.f32.mrf.mxu0
    %v94 = vpop.f32.mrf.mxu0
    %95 = vdwg.mxu0
    %v96 = vmax.f32 %v91, 0.0
    %v97 = vpack.c.bf16 %v96, %v96
    %v98 = vld [vmem:[%s3] sm:$0xff]
    %v99 = vld [vmem:[%s3 + $0x8] sm:$0xff]
    %v100 = vld [vmem:[%s3 + $0x10] sm:$0xff]
    %v101 = vld [vmem:[%s3 + $0x18] sm:$0xff]
    %v102 = vld [vmem:[%s3 + $0x20] sm:$0xff]
    %v103 = vld [vmem:[%s3 + $0x28] sm:$0xff]
    %v104 = vld [vmem:[%s3 + $0x30] sm:$0xff]
    %v105 = vld [vmem:[%s3 + $0x38] sm:$0xff]
    %v106 = vld [vmem:[%s3 + $0x40] sm:$0xff]
    %v107 = vld [vmem:[%s3 + $0x48] sm:$0xff]
    %v108 = vld [vmem:[%s3 + $0x50] sm:$0xff]
    %v109 = vld [vmem:[%s3 + $0x58] sm:$0xff]
    %v110 = vld [vmem:[%s3 + $0x60] sm:$0xff]
    %v111 = vld [vmem:[%s3 + $0x68] sm:$0xff]
    %v112 = vld [vmem:[%s3 + $0x70] sm:$0xff]
    %v113 = vld [vmem:[%s3 + $0x78] sm:$0xff]
    %v114 = vld [vmem:[%s4] sm:$0x3]
    %v116 = vlaneseq
    %v117 = vshrl.u32 %v116, 7
    %v118 = vsub.s32 0, %v117
    %v119 = vrot.slane %v114, %v118
    %v120 = vlaneseq
    %v121 = vshrl.u32 %v120, 7
    %v122 = vsub.s32 1, %v121
    %v123 = vrot.slane %v114, %v122
    %v142 = vunpack.c.l.b16 %v98
    %v143 = vunpack.c.h.b16 %v98
    %v144 = vunpack.c.l.b16 %v99
    %v145 = vunpack.c.h.b16 %v99
    %v146 = vunpack.c.l.b16 %v100
    %v147 = vunpack.c.h.b16 %v100
    %v148 = vunpack.c.l.b16 %v101
    %v149 = vunpack.c.h.b16 %v101
    %v150 = vunpack.c.l.b16 %v102
    %v151 = vunpack.c.h.b16 %v102
    %v152 = vunpack.c.l.b16 %v103
    %v153 = vunpack.c.h.b16 %v103
    %v154 = vunpack.c.l.b16 %v104
    %v155 = vunpack.c.h.b16 %v104
    %v156 = vunpack.c.l.b16 %v105
    %v157 = vunpack.c.h.b16 %v105
    %v158 = vunpack.c.l.b16 %v106
    %v159 = vunpack.c.h.b16 %v106
    %v160 = vunpack.c.l.b16 %v107
    %v161 = vunpack.c.h.b16 %v107
    %v162 = vunpack.c.l.b16 %v108
    %v163 = vunpack.c.h.b16 %v108
    %v164 = vunpack.c.l.b16 %v109
    %v165 = vunpack.c.h.b16 %v109
    %v166 = vunpack.c.l.b16 %v110
    %v167 = vunpack.c.h.b16 %v110
    %v168 = vunpack.c.l.b16 %v111
    %v169 = vunpack.c.h.b16 %v111
    %v170 = vunpack.c.l.b16 %v112
    %v171 = vunpack.c.h.b16 %v112
    %v172 = vunpack.c.l.b16 %v113
    %v173 = vunpack.c.h.b16 %v113
    %v174 = vpack.c.b16 %v144, %v142
    %v175 = vpack.c.b16 %v145, %v143
    %v176 = vpack.c.b16 %v148, %v146
    %v177 = vpack.c.b16 %v149, %v147
    %v178 = vpack.c.b16 %v152, %v150
    %v179 = vpack.c.b16 %v153, %v151
    %v180 = vpack.c.b16 %v156, %v154
    %v181 = vpack.c.b16 %v157, %v155
    %v182 = vpack.c.b16 %v160, %v158
    %v183 = vpack.c.b16 %v161, %v159
    %v184 = vpack.c.b16 %v164, %v162
    %v185 = vpack.c.b16 %v165, %v163
    %v186 = vpack.c.b16 %v168, %v166
    %v187 = vpack.c.b16 %v169, %v167
    %v188 = vpack.c.b16 %v172, %v170
    %v189 = vpack.c.b16 %v173, %v171
    %206 = vmatprep.subr.bf16.mxu0 %v189
    %207 = vmatpush1.bf16.msra.mxu0 %v188
    %208 = vmatprep.subr.bf16.mxu0 %v187
    %209 = vmatpush1.bf16.msra.mxu0 %v186
    %210 = vmatprep.subr.bf16.mxu0 %v185
    %211 = vmatpush1.bf16.msra.mxu0 %v184
    %212 = vmatprep.subr.bf16.mxu0 %v183
    %213 = vmatpush1.bf16.msra.mxu0 %v182
    %214 = vmatprep.subr.bf16.mxu0 %v181
    %215 = vmatpush1.bf16.msra.mxu0 %v180
    %216 = vmatprep.subr.bf16.mxu0 %v179
    %217 = vmatpush1.bf16.msra.mxu0 %v178
    %218 = vmatprep.subr.bf16.mxu0 %v177
    %219 = vmatpush1.bf16.msra.mxu0 %v176
    %220 = vmatprep.subr.bf16.mxu0 %v175
    %221 = vmatpush1.bf16.msra.mxu0 %v174
    %222 = vmatprep.subr.bf16.mxu0 0
    %223 = vmatpush2.bf16.msra.mxu0 0
    %224 = vmatprep.subr.bf16.mxu0 0
    %225 = vmatpush2.bf16.msra.mxu0 0
    %226 = vmatprep.subr.bf16.mxu0 0
    %227 = vmatpush2.bf16.msra.mxu0 0
    %228 = vmatprep.subr.bf16.mxu0 0
    %229 = vmatpush2.bf16.msra.mxu0 0
    %230 = vmatprep.subr.bf16.mxu0 0
    %231 = vmatpush2.bf16.msra.mxu0 0
    %232 = vmatprep.subr.bf16.mxu0 0
    %233 = vmatpush2.bf16.msra.mxu0 0
    %234 = vmatprep.subr.bf16.mxu0 0
    %235 = vmatpush2.bf16.msra.mxu0 0
    %236 = vmatprep.subr.bf16.mxu0 0
    %237 = vmatpush2.bf16.msra.mxu0 0
    %238 = vmatprep.mubr.bf16.mxu0 0
    %239 = vmatmul.mubr.bf16.gmra.mxu0 %v97
    %v240 = vpop.f32.mrf.mxu0
    %v241 = vadd.f32 %v119, %v240
    %v242 = vpop.f32.mrf.mxu0
    %v243 = vadd.f32 %v123, %v242
    %v244 = vpop.f32.mrf.mxu0
    %v245 = vpop.f32.mrf.mxu0
    %246 = vdwg.mxu0
    %v247 = vmax.f32 %v241, 0.0
    %v248 = vmax.f32 %v243, 0.0
    %v249 = vpack.c.bf16 %v247, %v247
    %v250 = vpack.c.bf16 %v248, %v248
    %v251 = vld [vmem:[%s5] sm:$0xf]
    %v252 = vld [vmem:[%s5 + $0x4] sm:$0xf]
    %v253 = vld [vmem:[%s5 + $0x8] sm:$0xf]
    %v254 = vld [vmem:[%s5 + $0xc] sm:$0xf]
    %v255 = vld [vmem:[%s5 + $0x10] sm:$0xf]
    %v256 = vld [vmem:[%s5 + $0x14] sm:$0xf]
    %v257 = vld [vmem:[%s5 + $0x18] sm:$0xf]
    %v258 = vld [vmem:[%s5 + $0x1c] sm:$0xf]
    %v259 = vld [vmem:[%s5 + $0x20] sm:$0xf]
    %v260 = vld [vmem:[%s5 + $0x24] sm:$0xf]
    %v261 = vld [vmem:[%s5 + $0x28] sm:$0xf]
    %v262 = vld [vmem:[%s5 + $0x2c] sm:$0xf]
    %v263 = vld [vmem:[%s5 + $0x30] sm:$0xf]
    %v264 = vld [vmem:[%s5 + $0x34] sm:$0xf]
    %v265 = vld [vmem:[%s5 + $0x38] sm:$0xf]
    %v266 = vld [vmem:[%s5 + $0x3c] sm:$0xf]
    %v267 = vld [vmem:[%s5 + $0x40] sm:$0xf]
    %v268 = vld [vmem:[%s5 + $0x44] sm:$0xf]
    %v269 = vld [vmem:[%s5 + $0x48] sm:$0xf]
    %v270 = vld [vmem:[%s5 + $0x4c] sm:$0xf]
    %v271 = vld [vmem:[%s5 + $0x50] sm:$0xf]
    %v272 = vld [vmem:[%s5 + $0x54] sm:$0xf]
    %v273 = vld [vmem:[%s5 + $0x58] sm:$0xf]
    %v274 = vld [vmem:[%s5 + $0x5c] sm:$0xf]
    %v275 = vld [vmem:[%s5 + $0x60] sm:$0xf]
    %v276 = vld [vmem:[%s5 + $0x64] sm:$0xf]
    %v277 = vld [vmem:[%s5 + $0x68] sm:$0xf]
    %v278 = vld [vmem:[%s5 + $0x6c] sm:$0xf]
    %v279 = vld [vmem:[%s5 + $0x70] sm:$0xf]
    %v280 = vld [vmem:[%s5 + $0x74] sm:$0xf]
    %v281 = vld [vmem:[%s5 + $0x78] sm:$0xf]
    %v282 = vld [vmem:[%s5 + $0x7c] sm:$0xf]
    %v283 = vld [vmem:[%s6] sm:$0x1]
    %v285 = vlaneseq
    %v286 = vshrl.u32 %v285, 7
    %v287 = vsub.s32 0, %v286
    %v288 = vrot.slane %v283, %v287
    %v322 = vunpack.c.l.b16 %v251
    %v323 = vunpack.c.l.b16 %v252
    %v324 = vunpack.c.l.b16 %v253
    %v325 = vunpack.c.l.b16 %v254
    %v326 = vunpack.c.l.b16 %v255
    %v327 = vunpack.c.l.b16 %v256
    %v328 = vunpack.c.l.b16 %v257
    %v329 = vunpack.c.l.b16 %v258
    %v330 = vunpack.c.l.b16 %v259
    %v331 = vunpack.c.l.b16 %v260
    %v332 = vunpack.c.l.b16 %v261
    %v333 = vunpack.c.l.b16 %v262
    %v334 = vunpack.c.l.b16 %v263
    %v335 = vunpack.c.l.b16 %v264
    %v336 = vunpack.c.l.b16 %v265
    %v337 = vunpack.c.l.b16 %v266
    %v338 = vunpack.c.l.b16 %v267
    %v339 = vunpack.c.l.b16 %v268
    %v340 = vunpack.c.l.b16 %v269
    %v341 = vunpack.c.l.b16 %v270
    %v342 = vunpack.c.l.b16 %v271
    %v343 = vunpack.c.l.b16 %v272
    %v344 = vunpack.c.l.b16 %v273
    %v345 = vunpack.c.l.b16 %v274
    %v346 = vunpack.c.l.b16 %v275
    %v347 = vunpack.c.l.b16 %v276
    %v348 = vunpack.c.l.b16 %v277
    %v349 = vunpack.c.l.b16 %v278
    %v350 = vunpack.c.l.b16 %v279
    %v351 = vunpack.c.l.b16 %v280
    %v352 = vunpack.c.l.b16 %v281
    %v353 = vunpack.c.l.b16 %v282
    %v354 = vpack.c.b16 %v323, %v322
    %v355 = vpack.c.b16 %v325, %v324
    %v356 = vpack.c.b16 %v327, %v326
    %v357 = vpack.c.b16 %v329, %v328
    %v358 = vpack.c.b16 %v331, %v330
    %v359 = vpack.c.b16 %v333, %v332
    %v360 = vpack.c.b16 %v335, %v334
    %v361 = vpack.c.b16 %v337, %v336
    %v362 = vpack.c.b16 %v339, %v338
    %v363 = vpack.c.b16 %v341, %v340
    %v364 = vpack.c.b16 %v343, %v342
    %v365 = vpack.c.b16 %v345, %v344
    %v366 = vpack.c.b16 %v347, %v346
    %v367 = vpack.c.b16 %v349, %v348
    %v368 = vpack.c.b16 %v351, %v350
    %v369 = vpack.c.b16 %v353, %v352
    %386 = vmatprep.subr.bf16.mxu0 0
    %387 = vmatpush1.bf16.msra.mxu0 %v361
    %388 = vmatprep.subr.bf16.mxu0 0
    %389 = vmatpush1.bf16.msra.mxu0 %v360
    %390 = vmatprep.subr.bf16.mxu0 0
    %391 = vmatpush1.bf16.msra.mxu0 %v359
    %392 = vmatprep.subr.bf16.mxu0 0
    %393 = vmatpush1.bf16.msra.mxu0 %v358
    %394 = vmatprep.subr.bf16.mxu0 0
    %395 = vmatpush1.bf16.msra.mxu0 %v357
    %396 = vmatprep.subr.bf16.mxu0 0
    %397 = vmatpush1.bf16.msra.mxu0 %v356
    %398 = vmatprep.subr.bf16.mxu0 0
    %399 = vmatpush1.bf16.msra.mxu0 %v355
    %400 = vmatprep.subr.bf16.mxu0 0
    %401 = vmatpush1.bf16.msra.mxu0 %v354
    %402 = vmatprep.subr.bf16.mxu0 0
    %403 = vmatpush2.bf16.msra.mxu0 %v369
    %404 = vmatprep.subr.bf16.mxu0 0
    %405 = vmatpush2.bf16.msra.mxu0 %v368
    %406 = vmatprep.subr.bf16.mxu0 0
    %407 = vmatpush2.bf16.msra.mxu0 %v367
    %408 = vmatprep.subr.bf16.mxu0 0
    %409 = vmatpush2.bf16.msra.mxu0 %v366
    %410 = vmatprep.subr.bf16.mxu0 0
    %411 = vmatpush2.bf16.msra.mxu0 %v365
    %412 = vmatprep.subr.bf16.mxu0 0
    %413 = vmatpush2.bf16.msra.mxu0 %v364
    %414 = vmatprep.subr.bf16.mxu0 0
    %415 = vmatpush2.bf16.msra.mxu0 %v363
    %416 = vmatprep.subr.bf16.mxu0 0
    %417 = vmatpush2.bf16.msra.mxu0 %v362
    %418 = vmatprep.mubr.bf16.mxu0 %v250
    %419 = vmatmul.mubr.bf16.gmra.mxu0 %v249
    %v420 = vpop.f32.mrf.mxu0
    %v421 = vadd.f32 %v288, %v420
    %v422 = vpop.f32.mrf.mxu0
    %v423 = vpop.f32.mrf.mxu0
    %v424 = vpop.f32.mrf.mxu0
    %425 = vdwg.mxu0
    %vm426 = vcmask 64512
    %427 = vst.msk [vmem:[#allocation2] sm:$0xff] %vm426, %v421
    // Predicated region
    $region30: #{dqn_forward.1} parent=1 // pred_check
      _
    $region31: #{dqn_forward.1} parent=1 // pred_check_branch
      %429 = sbr.rel (0) target = $region33
    $region32: #{dqn_forward.1} parent=1 // pred_region
      %s431 = ssub.s32 128, 128
      %432 = vsyncadd [#allocation3], %s431
      %s434 = sshll.u32 [#allocation2], 4
      %s435 = int_to_ptr.vmem [resolvable:$true] %s434
      %437 = dma.vmem_to_hbm [thread:$0]  %s435, 128, %s7, [#allocation3]
    $region33: #{dqn_forward.1} parent=1 // pred_fallthru
      _
    // Predicated region
    $region34: #{dqn_forward.1} parent=1 // pred_check
      _
    $region35: #{dqn_forward.1} parent=1 // pred_check_branch
      %439 = sbr.rel (0) target = $region37
    $region36: #{dqn_forward.1} parent=1 // pred_region
      %440 = dma.done [#allocation3], 128
    $region37: #{dqn_forward.1} parent=1 // pred_fallthru
      _
    %441 = vsyncpa [#allocation3], 1

</llo_original>
